<compile_context>
chip_gen: v7x
topology: tpu7x:2x2x1
jax: 0.10.0
libtpu: 0.0.40
codegen_flags: <defaults>
</compile_context>

<pallas_src>
import jax
import jax.numpy as jnp
from jax import lax
from jax.experimental import pallas as pl
from jax.experimental.pallas import tpu as pltpu

_LANES = 128
_SUB_ROWS = 2048              # in-kernel sub-chunk rows (bounds f32 temps to ~1 MiB each)
_MAX_BLOCK_BYTES = 8 << 20    # ~8 MiB HBM bytes per grid block (review: 4-8 MiB for v7x)
_MIN_BLOCK_BYTES = 512 << 10  # don't split below ~512 KiB blocks (per-step overhead floor)


def _round_up(v, m):
    return ((v + m - 1) // m) * m


def _mish_math(x, out_dtype):
    """Stable, single-exp Mish: x * tanh(softplus(x)). Math in f32."""
    x = x.astype(jnp.float32)
    # tanh(softplus(x)) = ((1+e^x)^2 - 1) / ((1+e^x)^2 + 1), with one exp(-|x|):
    #   x >= 0:  (1 + 2t) / (1 + 2t + 2t^2),   t = e^{-x}
    #   x <  0:  (2t + t^2) / (2 + 2t + t^2),  t = e^{x}
    t = jnp.exp(-jnp.abs(x))
    t2 = t * t
    pos = x >= 0.0
    num = jnp.where(pos, 1.0 + 2.0 * t, 2.0 * t + t2)
    den = jnp.where(pos, 1.0 + 2.0 * t + 2.0 * t2, 2.0 + 2.0 * t + t2)
    return (x * (num / den)).astype(out_dtype)


def _mish_kernel(x_ref, o_ref):
    rows = x_ref.shape[0]          # static block row count
    n_full = rows // _SUB_ROWS

    if n_full > 0:
        def body(i, carry):
            s = pl.multiple_of(i * _SUB_ROWS, _SUB_ROWS)
            o_ref[pl.ds(s, _SUB_ROWS), :] = _mish_math(
                x_ref[pl.ds(s, _SUB_ROWS), :], o_ref.dtype)
            return carry
        lax.fori_loop(0, n_full, body, 0)

    rem_start = n_full * _SUB_ROWS
    if rem_start < rows:           # static remainder chunk
        o_ref[rem_start:, :] = _mish_math(x_ref[rem_start:, :], o_ref.dtype)


def _mish_2d(x2d):
    """Run the Pallas kernel over a lane-dense (rows, 128) slab."""
    rows, lanes = x2d.shape
    itemsize = jnp.dtype(x2d.dtype).itemsize
    mult = max(8, 32 // itemsize)                      # sublane packing: 8 f32, 16 bf16, 32 fp8
    row_bytes = lanes * itemsize
    max_tile = max(mult, (_MAX_BLOCK_BYTES // row_bytes) // mult * mult)
    min_tile = max(mult, (_MIN_BLOCK_BYTES // row_bytes) // mult * mult)

    if rows <= min_tile:
        tile = rows                                    # tiny input: one full-extent block
    else:
        # Aim for >= 4 grid steps (pipelining + both v7x TCs), constant-byte blocks.
        tile = _round_up(pl.cdiv(rows, 4), mult)
        tile = min(max(tile, min_tile), max_tile)

    grid = (pl.cdiv(rows, tile),)
    n_elems = rows * lanes
    return pl.pallas_call(
        _mish_kernel,
        out_shape=jax.ShapeDtypeStruct((rows, lanes), x2d.dtype),
        grid=grid,
        in_specs=[pl.BlockSpec((tile, lanes), lambda i: (i, 0))],
        out_specs=pl.BlockSpec((tile, lanes), lambda i: (i, 0)),
        compiler_params=pltpu.CompilerParams(
            dimension_semantics=("parallel",),
            vmem_limit_bytes=48 << 20,
        ),
        cost_estimate=pl.CostEstimate(
            flops=15 * n_elems,
            transcendentals=n_elems,
            bytes_accessed=2 * n_elems * itemsize,
        ),
    )(x2d)


def mish(x):
    """Elementwise Mish via a Pallas TPU kernel. Any shape, floating dtype."""
    assert jnp.issubdtype(x.dtype, jnp.floating), "mish expects a floating dtype"
    orig_shape = x.shape
    flat = x.reshape(-1)
    n = flat.shape[0]
    rem = n % _LANES
    n0 = n - rem

    if rem == 0:
        out_flat = _mish_2d(flat.reshape(n0 // _LANES, _LANES)).reshape(-1)
    else:
        # Ragged path: kernel the 128-aligned prefix, tiny (<128 elem) tail in plain jnp.
        pieces = []
        if n0:
            pieces.append(_mish_2d(flat[:n0].reshape(n0 // _LANES, _LANES)).reshape(-1))
        pieces.append(_mish_math(flat[n0:], x.dtype))
        out_flat = jnp.concatenate(pieces) if len(pieces) > 1 else pieces[0]

    return out_flat.reshape(orig_shape)


def _mish_ref(x):
    # Pure-JAX reference: x * tanh(softplus(x)) with stable softplus.
    xf = x.astype(jnp.float32)
    sp = jnp.maximum(xf, 0.0) + jnp.log1p(jnp.exp(-jnp.abs(xf)))
    return (xf * jnp.tanh(sp)).astype(x.dtype)


if __name__ == "__main__":
    key = jax.random.PRNGKey(0)

    # Primary test: NCHW input, batch=2, channels=4, spatial=16x16 (f32).
    x = jax.random.normal(key, (2, 4, 16, 16), dtype=jnp.float32) * 3.0
    y = jax.block_until_ready(mish(x))
    y_ref = _mish_ref(x)
    assert y.shape == x.shape and y.dtype == x.dtype
    assert jnp.allclose(y, y_ref, atol=1e-5, rtol=1e-5)

    # Ragged tail only (105 elems): pure-jnp tail path.
    x2 = jax.random.normal(jax.random.PRNGKey(1), (3, 5, 7), dtype=jnp.float32) * 3.0
    y2 = jax.block_until_ready(mish(x2))
    assert jnp.allclose(y2, _mish_ref(x2), atol=1e-5, rtol=1e-5)

    # Ragged with an aligned prefix (130 elems): kernel prefix + jnp tail + concat.
    x2b = jax.random.normal(jax.random.PRNGKey(3), (130,), dtype=jnp.float32) * 3.0
    y2b = jax.block_until_ready(mish(x2b))
    assert jnp.allclose(y2b, _mish_ref(x2b), atol=1e-5, rtol=1e-5)

    # bf16 path: blocks stay bf16 in HBM, f32 math inside the kernel.
    x3 = (jax.random.normal(jax.random.PRNGKey(2), (2, 4, 16, 16)) * 3.0).astype(jnp.bfloat16)
    y3 = jax.block_until_ready(mish(x3))
    assert y3.dtype == jnp.bfloat16
    assert jnp.allclose(y3.astype(jnp.float32),
                        _mish_ref(x3).astype(jnp.float32), atol=2e-2, rtol=2e-2)

    # Larger f32 slab (1M elems): exercises multi-step grid + in-kernel fori_loop sub-chunks.
    x4 = jax.random.normal(jax.random.PRNGKey(4), (8192, 128), dtype=jnp.float32) * 3.0
    y4 = jax.block_until_ready(mish(x4))
    assert jnp.allclose(y4, _mish_ref(x4), atol=1e-5, rtol=1e-5)

    print("KERNEL_OK")
</pallas_src>

<mosaic_0001>
module attributes {stable_mosaic.version = 11 : i64} {
  func.func @_mish_kernel(%arg0: i32, %arg1: memref<16x128xf32, #tpu.memory_space<vmem>>, %arg2: memref<16x128xf32, #tpu.memory_space<vmem>>) attributes {dimension_semantics = [#tpu.dimension_semantics<parallel>], iteration_bounds = array<i64: 1>, scalar_prefetch = 0 : i64, scratch_operands = 0 : i64, tpu.core_type = #tpu.core_type<tc>, window_params = [{transform_indices = @transform_0, window_bounds = array<i64: 16, 128>}, {transform_indices = @transform_1, window_bounds = array<i64: 16, 128>}]} {
    %c0 = arith.constant 0 : index
    %c0_0 = arith.constant 0 : index
    %0 = vector.load %arg1[%c0, %c0_0] : memref<16x128xf32, #tpu.memory_space<vmem>>, vector<16x128xf32>
    %1 = math.absf %0 : vector<16x128xf32>
    %cst = arith.constant 0.000000e+00 : f32
    %2 = vector.broadcast %cst : f32 to vector<16x128xf32>
    %3 = arith.subf %2, %1 : vector<16x128xf32>
    %4 = math.exp %3 : vector<16x128xf32>
    %5 = arith.mulf %4, %4 : vector<16x128xf32>
    %cst_1 = arith.constant 0.000000e+00 : f32
    %6 = vector.broadcast %cst_1 : f32 to vector<16x128xf32>
    %7 = arith.cmpf oge, %0, %6 : vector<16x128xf32>
    %cst_2 = arith.constant 2.000000e+00 : f32
    %8 = vector.broadcast %cst_2 : f32 to vector<16x128xf32>
    %9 = arith.mulf %8, %4 : vector<16x128xf32>
    %cst_3 = arith.constant 1.000000e+00 : f32
    %10 = vector.broadcast %cst_3 : f32 to vector<16x128xf32>
    %11 = arith.addf %10, %9 : vector<16x128xf32>
    %cst_4 = arith.constant 2.000000e+00 : f32
    %12 = vector.broadcast %cst_4 : f32 to vector<16x128xf32>
    %13 = arith.mulf %12, %4 : vector<16x128xf32>
    %14 = arith.addf %13, %5 : vector<16x128xf32>
    %15 = arith.select %7, %11, %14 : vector<16x128xi1>, vector<16x128xf32>
    %cst_5 = arith.constant 2.000000e+00 : f32
    %16 = vector.broadcast %cst_5 : f32 to vector<16x128xf32>
    %17 = arith.mulf %16, %4 : vector<16x128xf32>
    %cst_6 = arith.constant 1.000000e+00 : f32
    %18 = vector.broadcast %cst_6 : f32 to vector<16x128xf32>
    %19 = arith.addf %18, %17 : vector<16x128xf32>
    %cst_7 = arith.constant 2.000000e+00 : f32
    %20 = vector.broadcast %cst_7 : f32 to vector<16x128xf32>
    %21 = arith.mulf %20, %5 : vector<16x128xf32>
    %22 = arith.addf %19, %21 : vector<16x128xf32>
    %cst_8 = arith.constant 2.000000e+00 : f32
    %23 = vector.broadcast %cst_8 : f32 to vector<16x128xf32>
    %24 = arith.mulf %23, %4 : vector<16x128xf32>
    %cst_9 = arith.constant 2.000000e+00 : f32
    %25 = vector.broadcast %cst_9 : f32 to vector<16x128xf32>
    %26 = arith.addf %25, %24 : vector<16x128xf32>
    %27 = arith.addf %26, %5 : vector<16x128xf32>
    %28 = arith.select %7, %22, %27 : vector<16x128xi1>, vector<16x128xf32>
    %29 = arith.divf %15, %28 : vector<16x128xf32>
    %30 = arith.mulf %0, %29 : vector<16x128xf32>
    %c0_10 = arith.constant 0 : index
    %c0_11 = arith.constant 0 : index
    %31 = vector.load %arg2[%c0_10, %c0_11] : memref<16x128xf32, #tpu.memory_space<vmem>>, vector<16x128xf32>
    tpu.vector_store %arg2[%c0_10, %c0_11], %30 {strides = array<i32>} : memref<16x128xf32, #tpu.memory_space<vmem>>, vector<16x128xf32>,
    return
  }
  func.func @transform_0(%arg0: i32) -> (i32, i32) {
    %c0_i32 = arith.constant 0 : i32
    %c0_i32_0 = arith.constant 0 : i32
    return %arg0, %c0_i32 : i32, i32
  }
  func.func @transform_1(%arg0: i32) -> (i32, i32) {
    %c0_i32 = arith.constant 0 : i32
    %c0_i32_0 = arith.constant 0 : i32
    return %arg0, %c0_i32 : i32, i32
  }
}

</mosaic_0001>

<llo_original>
// kernel: tpu_custom_call.1
$region0: #{tpu_custom_call.1}
  #allocation0 [shape = 'u32[]', space=smem, size = 0x4, offset = 0x4, fixed_abs, tag = 'smem constant byte address 0x4 - core index']
  #allocation1 [shape = 'u32[144,128]{1,0:T(1,128)}', space=vmem, size = 0x12000, scoped, tag = 'internal scratch']
  %s0 = inlined_call_operand.hbm [shape: f32[16,128], index: 0, kind: input, shape index: {}]
  %s1 = inlined_call_operand.hbm [shape: f32[16,128], index: 1, kind: output, shape index: {}]
  %s2 = sld [smem:[#allocation0]]
  $region18: #{tpu_custom_call.1} parent=0
    _
  %s4 = ssub.s32 1, %s2
  %s5 = scalar_select 0, %s4, %s2
  $region1: #{tpu_custom_call.1} parent=0
    #allocation2 [shape = 'u8[8192]{0}', space=vmem, size = 0x2000, scoped, tag = 'input window, operand 0, single buffered']
    #allocation3 [shape = 's32[1]{0}', space=sflag, size = 0x4, scoped, tag = 'scoped memory for tpu_custom_call.1']
    #allocation4 [shape = 's32[1]{0}', space=sflag, size = 0x4, scoped, tag = 'scoped memory for tpu_custom_call.1']
    #allocation5 [shape = 'u8[8192]{0}', space=vmem, size = 0x2000, scoped, tag = 'output window, operand 0, single buffered']
    %6 = vsyncpa [#allocation3], 0
    %7 = vsyncpa [#allocation4], 0
    // Predicated region
    $region2: #{tpu_custom_call.1} parent=1 // pred_check
      _
    $region3: #{tpu_custom_call.1} parent=1 // pred_check_branch
      %9 = sbr.rel (0) target = $region5
    $region4: #{tpu_custom_call.1} parent=1 // pred_region
      %s11 = ssub.s32 256, 256
      %12 = vsyncadd [#allocation3], %s11
      %s13 = sshll.u32 [#allocation2], 4
      %s14 = int_to_ptr.vmem [resolvable:$true] %s13
      %19 = dma.hbm_to_vmem [thread:$0]  %s0, 256, %s14, [#allocation3], 128, 128, 8
    $region5: #{tpu_custom_call.1} parent=1 // pred_fallthru
      _
    // Predicated region
    $region6: #{tpu_custom_call.1} parent=1 // pred_check
      _
    $region7: #{tpu_custom_call.1} parent=1 // pred_check_branch
      %21 = sbr.rel (0) target = $region9
    $region8: #{tpu_custom_call.1} parent=1 // pred_region
      %22 = dma.done [#allocation3], 256
    $region9: #{tpu_custom_call.1} parent=1 // pred_fallthru
      _
    %v23 = vld [vmem:[#allocation2] sm:$0xff]
    %v24 = vld [vmem:[#allocation2 + $0x8] sm:$0xff]
    %v25 = vand.u32 2147483647, %v23
    %v26 = vand.u32 2147483647, %v24
    %v27 = vsub.f32 0.0, %v25
    %v28 = vsub.f32 0.0, %v26
    %v29 = vmul.f32 %v27, 1.442695
    %v30 = vpow.pop %v29
    %v31 = vmul.f32 %v28, 1.442695
    %v32 = vpow.pop %v31
    %v33 = vmul.f32 %v30, %v30
    %v34 = vmul.f32 %v32, %v32
    %vm35 = vcmp.ge.f32.partialorder %v23, 0.0
    %vm36 = vcmp.ge.f32.partialorder %v24, 0.0
    %v37 = vmul.f32 %v30, 2.0
    %v38 = vmul.f32 %v32, 2.0
    %v39 = vadd.f32 %v37, 1.0
    %v40 = vadd.f32 %v38, 1.0
    %v41 = vadd.f32 %v37, %v33
    %v42 = vadd.f32 %v38, %v34
    %v43 = vsel %vm35, %v39, %v41
    %v44 = vsel %vm36, %v40, %v42
    %v45 = vmul.f32 %v33, 2.0
    %v46 = vmul.f32 %v34, 2.0
    %v47 = vadd.f32 %v39, %v45
    %v48 = vadd.f32 %v40, %v46
    %v49 = vadd.f32 %v37, 2.0
    %v50 = vadd.f32 %v38, 2.0
    %v51 = vadd.f32 %v49, %v33
    %v52 = vadd.f32 %v50, %v34
    %v53 = vsel %vm35, %v47, %v51
    %v54 = vsel %vm36, %v48, %v52
    %v55 = vrcp.pop %v53
    %v56 = vmul.f32 %v43, %v55
    %v57 = vrcp.pop %v54
    %v58 = vmul.f32 %v44, %v57
    %v59 = vmul.f32 %v23, %v56
    %v60 = vmul.f32 %v24, %v58
    %61 = vst [vmem:[#allocation5] sm:$0xff] %v59
    %62 = vst [vmem:[#allocation5 + $0x8] sm:$0xff] %v60
    // Predicated region
    $region10: #{tpu_custom_call.1} parent=1 // pred_check
      _
    $region11: #{tpu_custom_call.1} parent=1 // pred_check_branch
      %64 = sbr.rel (0) target = $region13
    $region12: #{tpu_custom_call.1} parent=1 // pred_region
      %s66 = ssub.s32 256, 256
      %67 = vsyncadd [#allocation4], %s66
      %s68 = sshll.u32 [#allocation5], 4
      %s69 = int_to_ptr.vmem [resolvable:$true] %s68
      %74 = dma.vmem_to_hbm [thread:$0]  %s69, 256, %s1, [#allocation4], 128, 128, 8
    $region13: #{tpu_custom_call.1} parent=1 // pred_fallthru
      _
    // Predicated region
    $region14: #{tpu_custom_call.1} parent=1 // pred_check
      _
    $region15: #{tpu_custom_call.1} parent=1 // pred_check_branch
      %76 = sbr.rel (0) target = $region17
    $region16: #{tpu_custom_call.1} parent=1 // pred_region
      %77 = dma.done [#allocation4], 256
    $region17: #{tpu_custom_call.1} parent=1 // pred_fallthru
      _
    %78 = vsyncpa [#allocation3], 1
    %79 = vsyncpa [#allocation4], 1

</llo_original>
